<compile_context>
chip_gen: v7x
topology: tpu7x:2x2x1
jax: 0.10.0
libtpu: 0.0.40
codegen_flags: <defaults>
</compile_context>

<pallas_src>
import functools

import numpy as np
import jax
import jax.numpy as jnp
from jax.experimental import pallas as pl
from jax.experimental.pallas import tpu as pltpu


_VMEM_LIMIT = 32 * 1024 * 1024        # explicit scoped-VMEM budget (safe on v5e/v6e/v7x)
_FUSED_BUDGET = 20 * 1024 * 1024      # fused path must fit comfortably under the limit


def _round_up(x, m):
    return (x + m - 1) // m * m


# ----------------------------------------------------------------------------
# Fused kernel (grid = (B,)): global-avg-pool + fc1/ReLU/fc2 + h_sigmoid +
# folded DyReLU affine + apply.  One HBM read of x and one write of out.
# ----------------------------------------------------------------------------
def _dyrelu_fused_kernel(*refs, inv_hw, c, shared):
    if shared:
        x_in_ref = x_out_ref = refs[0]
        w1_ref, b1_ref, w2_ref, b2_ref, cs_ref, co_ref, o_ref = refs[1:]
    else:
        x_in_ref, x_out_ref = refs[0], refs[1]
        w1_ref, b1_ref, w2_ref, b2_ref, cs_ref, co_ref, o_ref = refs[2:]

    x_in = x_in_ref[...]                                                 # (C, HW)
    pooled = jnp.sum(x_in, axis=1, keepdims=True) * inv_hw               # (C, 1)
    hidden = jnp.dot(w1_ref[...], pooled,
                     preferred_element_type=jnp.float32) + b1_ref[...]
    hidden = jnp.maximum(hidden, 0.0)                                    # (S, 1)
    raw = jnp.dot(w2_ref[...], hidden,
                  preferred_element_type=jnp.float32) + b2_ref[...]      # (4C, 1)
    y = jnp.clip(raw + 3.0, 0.0, 6.0) * (1.0 / 6.0)                      # h_sigmoid
    coef = y * cs_ref[...] + co_ref[...]                                 # folded affine
    a1 = coef[0 * c:1 * c, :]
    b1 = coef[1 * c:2 * c, :]
    a2 = coef[2 * c:3 * c, :]
    b2 = coef[3 * c:4 * c, :]
    x_out = x_in if shared else x_out_ref[...]
    o_ref[...] = jnp.maximum(x_out * a1 + b1, x_out * a2 + b2)


# ----------------------------------------------------------------------------
# Tiled kernel 1: global avg pool (tiled, masked reduction) + MLP + h_sigmoid
#                 + folded DyReLU affine, producing a (4C, 1) column per batch.
# ----------------------------------------------------------------------------
def _pool_mlp_coef_kernel(x_ref, w1_ref, b1_ref, w2_ref, b2_ref,
                          cs_ref, co_ref, coef_ref, acc_ref, *, hw):
    t = pl.program_id(1)

    @pl.when(t == 0)
    def _():
        acc_ref[...] = jnp.zeros_like(acc_ref)

    x = x_ref[...]                                                       # (C, tile)
    c, tile = x.shape
    # Mask the ragged tail of the last tile (edge-block contents past HW are
    # undefined) before accumulating.  No-op for full tiles.
    lane = jax.lax.broadcasted_iota(jnp.int32, (c, tile), 1)
    valid = hw - t * tile
    x = jnp.where(lane < valid, x, 0.0)
    # Deferred cross-lane reduction: keep a (C, 128) accumulator and add the
    # tile's 128-lane groups with pure VPU adds; the single 128->1 XLU reduce
    # happens once, on the final tile, right before the tiny MLP.
    part = x[:, 0:128]
    for g in range(1, tile // 128):
        part = part + x[:, g * 128:(g + 1) * 128]
    acc_ref[...] += part

    @pl.when(t == pl.num_programs(1) - 1)
    def _():
        pooled = jnp.sum(acc_ref[...], axis=1, keepdims=True) * (1.0 / hw)  # (C, 1)
        hidden = jnp.dot(w1_ref[...], pooled,
                         preferred_element_type=jnp.float32) + b1_ref[...]
        hidden = jnp.maximum(hidden, 0.0)                                   # (S, 1)
        raw = jnp.dot(w2_ref[...], hidden,
                      preferred_element_type=jnp.float32) + b2_ref[...]     # (4C, 1)
        y = jnp.clip(raw + 3.0, 0.0, 6.0) * (1.0 / 6.0)                     # h_sigmoid
        coef_ref[...] = y * cs_ref[...] + co_ref[...]


# ----------------------------------------------------------------------------
# Tiled kernel 2: out = max(x*a1 + b1, x*a2 + b2), lane-dense spatial tiles.
# ----------------------------------------------------------------------------
def _dyrelu_apply_kernel(x_ref, coef_ref, o_ref, *, c):
    x = x_ref[...]                                                       # (C, T)
    a1 = coef_ref[0 * c:1 * c, :]                                        # (C, 1)
    b1 = coef_ref[1 * c:2 * c, :]
    a2 = coef_ref[2 * c:3 * c, :]
    b2 = coef_ref[3 * c:4 * c, :]
    o_ref[...] = jnp.maximum(x * a1 + b1, x * a2 + b2)


# ----------------------------------------------------------------------------
# Parameters (deterministic; mirrors DyReLU.__init__ with the default config:
# reduction=4, lambda_a=1.0, K2=True, use_bias=True, use_spatial=False -> exp=4)
# ----------------------------------------------------------------------------
def _make_divisible(v, divisor, min_value=None):
    if min_value is None:
        min_value = divisor
    new_v = max(min_value, int(v + divisor / 2) // divisor * divisor)
    if new_v < 0.9 * v:
        new_v += divisor
    return new_v


def init_params(key, inp, reduction=4, lambda_a=1.0,
                init_a=(1.0, 0.0), init_b=(0.0, 0.0)):
    squeeze = inp // reduction if reduction == 4 else _make_divisible(inp // reduction, 4)
    k1, k2, k3, k4 = jax.random.split(key, 4)
    raw = dict(
        inp=inp, squeeze=squeeze, lambda_a=lambda_a * 2.0,
        init_a=init_a, init_b=init_b,
        w1=0.2 * jax.random.normal(k1, (squeeze, inp), jnp.float32),   # torch Linear (out,in)
        b1=0.1 * jax.random.normal(k2, (squeeze,), jnp.float32),
        w2=0.2 * jax.random.normal(k3, (4 * inp, squeeze), jnp.float32),
        b2=0.1 * jax.random.normal(k4, (4 * inp,), jnp.float32),
    )

    # kernel-side params: column-vector layout; DyReLU (y-0.5)*L + init folded
    # into a single per-row scale/offset applied right after h_sigmoid.
    L = raw["lambda_a"]
    c = inp
    cs = jnp.concatenate([jnp.full((c,), L), jnp.ones((c,)),
                          jnp.full((c,), L), jnp.ones((c,))]).astype(jnp.float32)
    co = jnp.concatenate([
        jnp.full((c,), init_a[0] - 0.5 * L),
        jnp.full((c,), init_b[0] - 0.5),
        jnp.full((c,), init_a[1] - 0.5 * L),
        jnp.full((c,), init_b[1] - 0.5)]).astype(jnp.float32)
    kern = dict(
        inp=inp, squeeze=squeeze,
        w1=raw["w1"], b1=raw["b1"].reshape(squeeze, 1),
        w2=raw["w2"], b2=raw["b2"].reshape(4 * inp, 1),
        cscale=cs.reshape(4 * inp, 1), coff=co.reshape(4 * inp, 1),
    )
    return raw, kern


# ----------------------------------------------------------------------------
# Forward wrapper
# ----------------------------------------------------------------------------
def _est_fused_vmem_bytes(c, s, hw, shared):
    f = 4  # f32
    slab = _round_up(c, 8) * _round_up(hw, 128) * f
    n_x = 1 if shared else 2
    wbytes = (_round_up(s, 8) * _round_up(c, 128)
              + _round_up(s, 8) * 128
              + _round_up(4 * c, 8) * _round_up(s, 128)
              + 3 * _round_up(4 * c, 8) * 128) * f
    # double-buffered x (+x_out) and out slabs, ~2 slab-sized temporaries for
    # the affine/max, double-buffered weights.
    return 2 * (n_x + 1) * slab + 2 * slab + 2 * wbytes


def _pick_tile(hw, c, tile_hw):
    tile_hw = max(128, tile_hw // 128 * 128)
    # keep a single (C, tile) f32 block around <= 4 MiB so double-buffered
    # in + out stays far inside the VMEM limit even for large C.
    cap = max(128, ((1 << 20) // max(c, 1)) // 128 * 128)
    return max(128, min(_round_up(hw, 128), tile_hw, cap))


def dyrelu_forward(kern, x, tile_hw=1024, max_fused_bytes=_FUSED_BUDGET):
    # mirrors the module's list handling: x may be [x_in, x_out]
    if isinstance(x, (list, tuple)):
        x_in, x_out = x[0], x[1]
    else:
        x_in = x_out = x
    shared = x_in is x_out
    B, C, H, W = x_in.shape
    assert C == kern["inp"]
    S = kern["squeeze"]
    HW = H * W

    xin_f = x_in.reshape(B, C, HW)                       # free reshape (lane-dense)
    xout_f = xin_f if shared else x_out.reshape(B, C, HW)
    weights = (kern["w1"], kern["b1"], kern["w2"], kern["b2"],
               kern["cscale"], kern["coff"])

    # ---------------- fused single-read path (common small/medium HW) -------
    if _est_fused_vmem_bytes(C, S, HW, shared) <= max_fused_bytes:
        x_spec = pl.BlockSpec((pl.Squeezed(), C, HW), lambda b: (b, 0, 0))
        w_specs = [pl.BlockSpec((S, C), lambda b: (0, 0)),
                   pl.BlockSpec((S, 1), lambda b: (0, 0)),
                   pl.BlockSpec((4 * C, S), lambda b: (0, 0)),
                   pl.BlockSpec((4 * C, 1), lambda b: (0, 0)),
                   pl.BlockSpec((4 * C, 1), lambda b: (0, 0)),
                   pl.BlockSpec((4 * C, 1), lambda b: (0, 0))]
        in_specs = ([x_spec] if shared else [x_spec, x_spec]) + w_specs
        args = ((xin_f,) if shared else (xin_f, xout_f)) + weights
        out = pl.pallas_call(
            functools.partial(_dyrelu_fused_kernel,
                              inv_hw=1.0 / HW, c=C, shared=shared),
            out_shape=jax.ShapeDtypeStruct((B, C, HW), x_out.dtype),
            grid_spec=pltpu.PrefetchScalarGridSpec(
                num_scalar_prefetch=0,
                grid=(B,),
                in_specs=in_specs,
                out_specs=pl.BlockSpec((pl.Squeezed(), C, HW),
                                       lambda b: (b, 0, 0)),
            ),
            compiler_params=pltpu.CompilerParams(
                dimension_semantics=("parallel",),
                vmem_limit_bytes=_VMEM_LIMIT),
        )(*args)
        return out.reshape(B, C, H, W)

    # ---------------- tiled two-pass fallback (large feature maps) ----------
    tile = _pick_tile(HW, C, tile_hw)
    n_hw = pl.cdiv(HW, tile)

    coef = pl.pallas_call(
        functools.partial(_pool_mlp_coef_kernel, hw=HW),
        out_shape=jax.ShapeDtypeStruct((B, 4 * C, 1), jnp.float32),
        grid_spec=pltpu.PrefetchScalarGridSpec(
            num_scalar_prefetch=0,
            grid=(B, n_hw),
            in_specs=[
                pl.BlockSpec((pl.Squeezed(), C, tile), lambda b, t: (b, 0, t)),
                pl.BlockSpec((S, C), lambda b, t: (0, 0)),
                pl.BlockSpec((S, 1), lambda b, t: (0, 0)),
                pl.BlockSpec((4 * C, S), lambda b, t: (0, 0)),
                pl.BlockSpec((4 * C, 1), lambda b, t: (0, 0)),
                pl.BlockSpec((4 * C, 1), lambda b, t: (0, 0)),
                pl.BlockSpec((4 * C, 1), lambda b, t: (0, 0)),
            ],
            out_specs=pl.BlockSpec((pl.Squeezed(), 4 * C, 1),
                                   lambda b, t: (b, 0, 0)),
            scratch_shapes=[pltpu.VMEM((C, 128), jnp.float32)],
        ),
        compiler_params=pltpu.CompilerParams(
            dimension_semantics=("parallel", "arbitrary"),
            vmem_limit_bytes=_VMEM_LIMIT),
    )(xin_f, *weights)

    out = pl.pallas_call(
        functools.partial(_dyrelu_apply_kernel, c=C),
        out_shape=jax.ShapeDtypeStruct((B, C, HW), x_out.dtype),
        grid_spec=pltpu.PrefetchScalarGridSpec(
            num_scalar_prefetch=0,
            grid=(B, n_hw),
            in_specs=[
                pl.BlockSpec((pl.Squeezed(), C, tile), lambda b, t: (b, 0, t)),
                pl.BlockSpec((pl.Squeezed(), 4 * C, 1), lambda b, t: (b, 0, 0)),
            ],
            out_specs=pl.BlockSpec((pl.Squeezed(), C, tile),
                                   lambda b, t: (b, 0, t)),
        ),
        compiler_params=pltpu.CompilerParams(
            dimension_semantics=("parallel", "parallel"),
            vmem_limit_bytes=_VMEM_LIMIT),
    )(xout_f, coef)

    return out.reshape(B, C, H, W)

# TODO(synk): use_spatial=True branch (1x1 Conv + BN spatial softmax gate) and
#             the exp=1/2 configurations are not implemented (defaults: exp=4, spa=None).


# ----------------------------------------------------------------------------
# Pure-JAX reference mirroring the PyTorch forward (default exp=4 path)
# ----------------------------------------------------------------------------
def dyrelu_reference(raw, x):
    if isinstance(x, (list, tuple)):
        x_in, x_out = x[0], x[1]
    else:
        x_in = x_out = x
    B, C, H, W = x_in.shape
    y = jnp.mean(x_in, axis=(2, 3))                          # (B, C)
    h = jnp.maximum(y @ raw["w1"].T + raw["b1"], 0.0)        # (B, S)
    z = h @ raw["w2"].T + raw["b2"]                          # (B, 4C)
    z = jnp.clip(z + 3.0, 0.0, 6.0) / 6.0                    # h_sigmoid (h_max=1)
    L = raw["lambda_a"]
    a1 = (z[:, 0 * C:1 * C] - 0.5) * L + raw["init_a"][0]
    b1 = z[:, 1 * C:2 * C] - 0.5 + raw["init_b"][0]
    a2 = (z[:, 2 * C:3 * C] - 0.5) * L + raw["init_a"][1]
    b2 = z[:, 3 * C:4 * C] - 0.5 + raw["init_b"][1]
    e = lambda v: v[:, :, None, None]
    return jnp.maximum(x_out * e(a1) + e(b1), x_out * e(a2) + e(b2))


# ----------------------------------------------------------------------------
if __name__ == "__main__":
    key = jax.random.PRNGKey(0)
    kp, kx1, kx2, kx3 = jax.random.split(key, 4)

    C = 32
    raw, kern = init_params(kp, C, reduction=4)

    # 1) fused path, aligned spatial (16x16), single tensor
    x1 = jax.random.normal(kx1, (2, C, 16, 16), jnp.float32)
    out1 = jax.block_until_ready(dyrelu_forward(kern, x1))
    ref1 = dyrelu_reference(raw, x1)
    assert out1.shape == x1.shape
    np.testing.assert_allclose(np.asarray(out1), np.asarray(ref1),
                               rtol=1e-4, atol=1e-4)

    # 2) fused path, non-128-multiple spatial (18x18), batch 1
    x2 = jax.random.normal(kx2, (1, C, 18, 18), jnp.float32)
    out2 = jax.block_until_ready(dyrelu_forward(kern, x2))
    ref2 = dyrelu_reference(raw, x2)
    assert out2.shape == x2.shape
    np.testing.assert_allclose(np.asarray(out2), np.asarray(ref2),
                               rtol=1e-4, atol=1e-4)

    # 3) tiled two-pass path (forced), ragged last tile, list input [x_in, x_out]
    x_in3 = jax.random.normal(kx3, (2, C, 18, 18), jnp.float32)
    x_out3 = x_in3 * 0.5 + 0.25
    out3 = jax.block_until_ready(
        dyrelu_forward(kern, [x_in3, x_out3], tile_hw=256, max_fused_bytes=0))
    ref3 = dyrelu_reference(raw, [x_in3, x_out3])
    assert out3.shape == x_in3.shape
    np.testing.assert_allclose(np.asarray(out3), np.asarray(ref3),
                               rtol=1e-4, atol=1e-4)

    # 4) fused path with distinct x_in / x_out
    out4 = jax.block_until_ready(dyrelu_forward(kern, [x_in3, x_out3]))
    np.testing.assert_allclose(np.asarray(out4), np.asarray(ref3),
                               rtol=1e-4, atol=1e-4)

    print("KERNEL_OK")
</pallas_src>

<mosaic_0001>
module attributes {stable_mosaic.version = 11 : i64} {
  func.func @_dyrelu_fused_kernel(%arg0: i32, %arg1: memref<1x32x256xf32, #tpu.memory_space<vmem>>, %arg2: memref<8x32xf32, #tpu.memory_space<vmem>>, %arg3: memref<8x1xf32, #tpu.memory_space<vmem>>, %arg4: memref<128x8xf32, #tpu.memory_space<vmem>>, %arg5: memref<128x1xf32, #tpu.memory_space<vmem>>, %arg6: memref<128x1xf32, #tpu.memory_space<vmem>>, %arg7: memref<128x1xf32, #tpu.memory_space<vmem>>, %arg8: memref<1x32x256xf32, #tpu.memory_space<vmem>>) attributes {dimension_semantics = [#tpu.dimension_semantics<parallel>], iteration_bounds = array<i64: 2>, scalar_prefetch = 0 : i64, scratch_operands = 0 : i64, tpu.core_type = #tpu.core_type<tc>, window_params = [{transform_indices = @transform_0, window_bounds = array<i64: 1, 32, 256>}, {pipeline_mode = #tpu.pipeline_mode<synchronous>, transform_indices = @transform_1, window_bounds = array<i64: 8, 32>}, {pipeline_mode = #tpu.pipeline_mode<synchronous>, transform_indices = @transform_2, window_bounds = array<i64: 8, 1>}, {pipeline_mode = #tpu.pipeline_mode<synchronous>, transform_indices = @transform_3, window_bounds = array<i64: 128, 8>}, {pipeline_mode = #tpu.pipeline_mode<synchronous>, transform_indices = @transform_4, window_bounds = array<i64: 128, 1>}, {pipeline_mode = #tpu.pipeline_mode<synchronous>, transform_indices = @transform_5, window_bounds = array<i64: 128, 1>}, {pipeline_mode = #tpu.pipeline_mode<synchronous>, transform_indices = @transform_6, window_bounds = array<i64: 128, 1>}, {transform_indices = @transform_7, window_bounds = array<i64: 1, 32, 256>}]} {
    %c0 = arith.constant 0 : index
    %c0_0 = arith.constant 0 : index
    %c0_1 = arith.constant 0 : index
    %0 = vector.load %arg1[%c0, %c0_0, %c0_1] : memref<1x32x256xf32, #tpu.memory_space<vmem>>, vector<1x32x256xf32>
    %1 = vector.shape_cast %0 : vector<1x32x256xf32> to vector<32x256xf32>
    %cst = arith.constant dense<0.000000e+00> : vector<32xf32>
    %2 = vector.multi_reduction <add>, %1, %cst [1] : vector<32x256xf32> to vector<32xf32>
    %3 = vector.shape_cast %2 : vector<32xf32> to vector<32x1xf32>
    %cst_2 = arith.constant 3.906250e-03 : f32
    %4 = vector.broadcast %cst_2 : f32 to vector<32x1xf32>
    %5 = arith.mulf %3, %4 : vector<32x1xf32>
    %c0_3 = arith.constant 0 : index
    %c0_4 = arith.constant 0 : index
    %6 = vector.load %arg2[%c0_3, %c0_4] : memref<8x32xf32, #tpu.memory_space<vmem>>, vector<8x32xf32>
    %cst_5 = arith.constant dense<0.000000e+00> : vector<8x1xf32>
    %7 = tpu.matmul %6, %5, %cst_5 {dimension_numbers = #tpu.dot_dimension_numbers<[1], [0], [0], [1], [0, 0, 1, 1], [], []>} : vector<8x32xf32>, vector<32x1xf32>, vector<8x1xf32> -> vector<8x1xf32>
    %c0_6 = arith.constant 0 : index
    %c0_7 = arith.constant 0 : index
    %8 = vector.load %arg3[%c0_6, %c0_7] : memref<8x1xf32, #tpu.memory_space<vmem>>, vector<8x1xf32>
    %9 = arith.addf %7, %8 : vector<8x1xf32>
    %cst_8 = arith.constant 0.000000e+00 : f32
    %10 = vector.broadcast %cst_8 : f32 to vector<8x1xf32>
    %11 = arith.maximumf %9, %10 : vector<8x1xf32>
    %c0_9 = arith.constant 0 : index
    %c0_10 = arith.constant 0 : index
    %12 = vector.load %arg4[%c0_9, %c0_10] : memref<128x8xf32, #tpu.memory_space<vmem>>, vector<128x8xf32>
    %cst_11 = arith.constant dense<0.000000e+00> : vector<128x1xf32>
    %13 = tpu.matmul %12, %11, %cst_11 {dimension_numbers = #tpu.dot_dimension_numbers<[1], [0], [0], [1], [0, 0, 1, 1], [], []>} : vector<128x8xf32>, vector<8x1xf32>, vector<128x1xf32> -> vector<128x1xf32>
    %c0_12 = arith.constant 0 : index
    %c0_13 = arith.constant 0 : index
    %14 = vector.load %arg5[%c0_12, %c0_13] : memref<128x1xf32, #tpu.memory_space<vmem>>, vector<128x1xf32>
    %15 = arith.addf %13, %14 : vector<128x1xf32>
    %cst_14 = arith.constant 3.000000e+00 : f32
    %16 = vector.broadcast %cst_14 : f32 to vector<128x1xf32>
    %17 = arith.addf %15, %16 : vector<128x1xf32>
    %cst_15 = arith.constant 0.000000e+00 : f32
    %cst_16 = arith.constant 6.000000e+00 : f32
    %18 = vector.broadcast %cst_15 : f32 to vector<128x1xf32>
    %19 = arith.maximumf %18, %17 : vector<128x1xf32>
    %20 = vector.broadcast %cst_16 : f32 to vector<128x1xf32>
    %21 = arith.minimumf %20, %19 : vector<128x1xf32>
    %cst_17 = arith.constant 0.166666672 : f32
    %22 = vector.broadcast %cst_17 : f32 to vector<128x1xf32>
    %23 = arith.mulf %21, %22 : vector<128x1xf32>
    %c0_18 = arith.constant 0 : index
    %c0_19 = arith.constant 0 : index
    %24 = vector.load %arg6[%c0_18, %c0_19] : memref<128x1xf32, #tpu.memory_space<vmem>>, vector<128x1xf32>
    %25 = arith.mulf %23, %24 : vector<128x1xf32>
    %c0_20 = arith.constant 0 : index
    %c0_21 = arith.constant 0 : index
    %26 = vector.load %arg7[%c0_20, %c0_21] : memref<128x1xf32, #tpu.memory_space<vmem>>, vector<128x1xf32>
    %27 = arith.addf %25, %26 : vector<128x1xf32>
    %28 = vector.extract_strided_slice %27 {offsets = [0, 0], sizes = [32, 1], strides = [1, 1]} : vector<128x1xf32> to vector<32x1xf32>
    %29 = vector.extract_strided_slice %27 {offsets = [32, 0], sizes = [32, 1], strides = [1, 1]} : vector<128x1xf32> to vector<32x1xf32>
    %30 = vector.extract_strided_slice %27 {offsets = [64, 0], sizes = [32, 1], strides = [1, 1]} : vector<128x1xf32> to vector<32x1xf32>
    %31 = vector.extract_strided_slice %27 {offsets = [96, 0], sizes = [32, 1], strides = [1, 1]} : vector<128x1xf32> to vector<32x1xf32>
    %32 = vector.broadcast %28 : vector<32x1xf32> to vector<32x256xf32>
    %33 = arith.mulf %1, %32 : vector<32x256xf32>
    %34 = vector.broadcast %29 : vector<32x1xf32> to vector<32x256xf32>
    %35 = arith.addf %33, %34 : vector<32x256xf32>
    %36 = vector.broadcast %30 : vector<32x1xf32> to vector<32x256xf32>
    %37 = arith.mulf %1, %36 : vector<32x256xf32>
    %38 = vector.broadcast %31 : vector<32x1xf32> to vector<32x256xf32>
    %39 = arith.addf %37, %38 : vector<32x256xf32>
    %40 = arith.maximumf %35, %39 : vector<32x256xf32>
    %c0_22 = arith.constant 0 : index
    %c0_23 = arith.constant 0 : index
    %c0_24 = arith.constant 0 : index
    %41 = vector.load %arg8[%c0_22, %c0_23, %c0_24] : memref<1x32x256xf32, #tpu.memory_space<vmem>>, vector<1x32x256xf32>
    %42 = vector.shape_cast %41 : vector<1x32x256xf32> to vector<32x256xf32>
    %43 = vector.shape_cast %40 : vector<32x256xf32> to vector<1x32x256xf32>
    tpu.vector_store %arg8[%c0_22, %c0_23, %c0_24], %43 {strides = array<i32>} : memref<1x32x256xf32, #tpu.memory_space<vmem>>, vector<1x32x256xf32>,
    return
  }
  func.func @transform_0(%arg0: i32) -> (i32, i32, i32) {
    %c0_i32 = arith.constant 0 : i32
    %c0_i32_0 = arith.constant 0 : i32
    %c0_i32_1 = arith.constant 0 : i32
    return %arg0, %c0_i32, %c0_i32_0 : i32, i32, i32
  }
  func.func @transform_1(%arg0: i32) -> (i32, i32) {
    %c0_i32 = arith.constant 0 : i32
    %c0_i32_0 = arith.constant 0 : i32
    %c0_i32_1 = arith.constant 0 : i32
    return %c0_i32, %c0_i32_0 : i32, i32
  }
  func.func @transform_2(%arg0: i32) -> (i32, i32) {
    %c0_i32 = arith.constant 0 : i32
    %c0_i32_0 = arith.constant 0 : i32
    %c0_i32_1 = arith.constant 0 : i32
    return %c0_i32, %c0_i32_0 : i32, i32
  }
  func.func @transform_3(%arg0: i32) -> (i32, i32) {
    %c0_i32 = arith.constant 0 : i32
    %c0_i32_0 = arith.constant 0 : i32
    %c0_i32_1 = arith.constant 0 : i32
    return %c0_i32, %c0_i32_0 : i32, i32
  }
  func.func @transform_4(%arg0: i32) -> (i32, i32) {
    %c0_i32 = arith.constant 0 : i32
    %c0_i32_0 = arith.constant 0 : i32
    %c0_i32_1 = arith.constant 0 : i32
    return %c0_i32, %c0_i32_0 : i32, i32
  }
  func.func @transform_5(%arg0: i32) -> (i32, i32) {
    %c0_i32 = arith.constant 0 : i32
    %c0_i32_0 = arith.constant 0 : i32
    %c0_i32_1 = arith.constant 0 : i32
    return %c0_i32, %c0_i32_0 : i32, i32
  }
  func.func @transform_6(%arg0: i32) -> (i32, i32) {
    %c0_i32 = arith.constant 0 : i32
    %c0_i32_0 = arith.constant 0 : i32
    %c0_i32_1 = arith.constant 0 : i32
    return %c0_i32, %c0_i32_0 : i32, i32
  }
  func.func @transform_7(%arg0: i32) -> (i32, i32, i32) {
    %c0_i32 = arith.constant 0 : i32
    %c0_i32_0 = arith.constant 0 : i32
    %c0_i32_1 = arith.constant 0 : i32
    return %arg0, %c0_i32, %c0_i32_0 : i32, i32, i32
  }
}

</mosaic_0001>

<llo_original>
// kernel: tpu_custom_call.1
$region0: #{tpu_custom_call.1}
  #allocation0 [shape = 'u32[]', space=smem, size = 0x4, offset = 0x4, fixed_abs, tag = 'smem constant byte address 0x4 - core index']
  #allocation1 [shape = 'u32[144,128]{1,0:T(1,128)}', space=vmem, size = 0x12000, scoped, tag = 'internal scratch']
  %s0 = inlined_call_operand.vmem [shape: f32[2,32,256], index: 0, kind: input, shape index: {}]
  %s1 = inlined_call_operand.vmem [shape: f32[8,32], index: 1, kind: input, shape index: {}]
  %s2 = inlined_call_operand.vmem [shape: f32[8,1], index: 2, kind: input, shape index: {}]
  %s3 = inlined_call_operand.vmem [shape: f32[128,8], index: 3, kind: input, shape index: {}]
  %s4 = inlined_call_operand.vmem [shape: f32[128,1], index: 4, kind: input, shape index: {}]
  %s5 = inlined_call_operand.vmem [shape: f32[128,1], index: 5, kind: input, shape index: {}]
  %s6 = inlined_call_operand.vmem [shape: f32[128,1], index: 6, kind: input, shape index: {}]
  %s7 = inlined_call_operand.hbm [shape: f32[2,32,256], index: 7, kind: output, shape index: {}]
  %s8 = sld [smem:[#allocation0]]
  $region61: #{tpu_custom_call.1} parent=0
    _
  %s10 = ssub.s32 1, %s8
  %s11 = scalar_select 0, %s10, %s8
  $region1: #{tpu_custom_call.1} parent=0
    #allocation2 [shape = 'u8[65536]{0}', space=vmem, size = 0x10000, scoped, tag = 'output window, operand 0']
    #allocation3 [shape = 's32[2]{0}', space=sflag, size = 0x8, scoped, tag = 'scoped memory for tpu_custom_call.1']
    %12 = vsyncpa [#allocation3], 0
    %s13 = scalar_lea.sflag [#allocation3], 1
    %14 = vsyncpa %s13, 0
    loop: start=0, step=1, limit=4
    $region2: #{tpu_custom_call.1} parent=1 // loop_pre_header
      _
    $region3: #{tpu_custom_call.1} parent=1 // loop_header
      %s16 = sphi 0, %s20
      %p17 = scmp.ge.s32.totalorder %s16, 4
      %s26 = sphi 0, %s28
      %s29 = sphi 0, %s26
      %s30 = sphi 0, %s29
      %s46 = sphi 0, %s30
      %s50 = sphi 0, %s50
      %s52 = sphi 0, %s50
      %s53 = sphi 0, %s52
      %s67 = sphi 0, %s53
      %s71 = sphi 0, %s71
      %s73 = sphi 0, %s71
      %s74 = sphi 0, %s73
      %s88 = sphi 0, %s74
      %s92 = sphi 0, %s92
      %s94 = sphi 0, %s92
      %s95 = sphi 0, %s94
      %s109 = sphi 0, %s95
      %s113 = sphi 0, %s113
      %s115 = sphi 0, %s113
      %s116 = sphi 0, %s115
      %s130 = sphi 0, %s116
      %s134 = sphi 0, %s134
      %s136 = sphi 0, %s134
      %s137 = sphi 0, %s136
      %s151 = sphi 0, %s137
      %s155 = sphi 0, %s155
      %s157 = sphi 0, %s155
      %s158 = sphi 0, %s157
      %s172 = sphi 0, %s158
      %s178 = sphi 0, %s180
      %s181 = sphi 0, %s178
      %s182 = sphi 0, %s181
      %s198 = sphi 0, %s182
    $region4: #{tpu_custom_call.1} parent=1 // loop_header_branch
      %19 = sbr.rel (%p17) target = $region8
    $region5: #{tpu_custom_call.1} parent=1 // loop_body
      %s21 = ssub.s32 %s16, 1
      %s22 = ssub.s32 %s16, 2
      %s23 = sadd.s32 %s16, 1
      %s24 = ssub.s32 %s16, %s23
      %p25 = scmp.eq.s32.totalorder %s24, 0
      %s27 = sadd.s32 %s26, 1
      %s28 = scalar_select %p25, %s26, %s27
      %p31 = pneg %p25
      %p32 = scmp.eq.s32.totalorder %s16, 1
      %p33 = por %p31, %p32
      %p34 = scmp.ne.s32.totalorder %s26, %s29
      %p35 = scmp.eq.s32.totalorder %s16, 0
      %p36 = por %p34, %p35
      %p37 = scmp.ne.s32.totalorder %s26, %s29
      %p38 = scmp.eq.s32.totalorder %s21, 1
      %p39 = por %p37, %p38
      %p40 = scmp.ne.s32.totalorder %s29, %s30
      %p41 = scmp.eq.s32.totalorder %s21, 0
      %p42 = por %p40, %p41
      %p43 = scmp.ne.s32.totalorder %s29, %s30
      %p44 = scmp.eq.s32.totalorder %s22, 1
      %p45 = por %p43, %p44
      %p47 = scmp.ne.s32.totalorder %s30, %s46
      %p48 = scmp.eq.s32.totalorder %s22, 0
      %p49 = por %p47, %p48
      %s51 = sadd.s32 %s50, 1
      %p54 = scmp.eq.s32.totalorder %s16, 1
      %p55 = scmp.ne.s32.totalorder %s50, %s52
      %p56 = scmp.eq.s32.totalorder %s16, 0
      %p57 = por %p55, %p56
      %p58 = scmp.ne.s32.totalorder %s50, %s52
      %p59 = scmp.eq.s32.totalorder %s21, 1
      %p60 = por %p58, %p59
      %p61 = scmp.ne.s32.totalorder %s52, %s53
      %p62 = scmp.eq.s32.totalorder %s21, 0
      %p63 = por %p61, %p62
      %p64 = scmp.ne.s32.totalorder %s52, %s53
      %p65 = scmp.eq.s32.totalorder %s22, 1
      %p66 = por %p64, %p65
      %p68 = scmp.ne.s32.totalorder %s53, %s67
      %p69 = scmp.eq.s32.totalorder %s22, 0
      %p70 = por %p68, %p69
      %s72 = sadd.s32 %s71, 1
      %p75 = scmp.eq.s32.totalorder %s16, 1
      %p76 = scmp.ne.s32.totalorder %s71, %s73
      %p77 = scmp.eq.s32.totalorder %s16, 0
      %p78 = por %p76, %p77
      %p79 = scmp.ne.s32.totalorder %s71, %s73
      %p80 = scmp.eq.s32.totalorder %s21, 1
      %p81 = por %p79, %p80
      %p82 = scmp.ne.s32.totalorder %s73, %s74
      %p83 = scmp.eq.s32.totalorder %s21, 0
      %p84 = por %p82, %p83
      %p85 = scmp.ne.s32.totalorder %s73, %s74
      %p86 = scmp.eq.s32.totalorder %s22, 1
      %p87 = por %p85, %p86
      %p89 = scmp.ne.s32.totalorder %s74, %s88
      %p90 = scmp.eq.s32.totalorder %s22, 0
      %p91 = por %p89, %p90
      %s93 = sadd.s32 %s92, 1
      %p96 = scmp.eq.s32.totalorder %s16, 1
      %p97 = scmp.ne.s32.totalorder %s92, %s94
      %p98 = scmp.eq.s32.totalorder %s16, 0
      %p99 = por %p97, %p98
      %p100 = scmp.ne.s32.totalorder %s92, %s94
      %p101 = scmp.eq.s32.totalorder %s21, 1
      %p102 = por %p100, %p101
      %p103 = scmp.ne.s32.totalorder %s94, %s95
      %p104 = scmp.eq.s32.totalorder %s21, 0
      %p105 = por %p103, %p104
      %p106 = scmp.ne.s32.totalorder %s94, %s95
      %p107 = scmp.eq.s32.totalorder %s22, 1
      %p108 = por %p106, %p107
      %p110 = scmp.ne.s32.totalorder %s95, %s109
      %p111 = scmp.eq.s32.totalorder %s22, 0
      %p112 = por %p110, %p111
      %s114 = sadd.s32 %s113, 1
      %p117 = scmp.eq.s32.totalorder %s16, 1
      %p118 = scmp.ne.s32.totalorder %s113, %s115
      %p119 = scmp.eq.s32.totalorder %s16, 0
      %p120 = por %p118, %p119
      %p121 = scmp.ne.s32.totalorder %s113, %s115
      %p122 = scmp.eq.s32.totalorder %s21, 1
      %p123 = por %p121, %p122
      %p124 = scmp.ne.s32.totalorder %s115, %s116
      %p125 = scmp.eq.s32.totalorder %s21, 0
      %p126 = por %p124, %p125
      %p127 = scmp.ne.s32.totalorder %s115, %s116
      %p128 = scmp.eq.s32.totalorder %s22, 1
      %p129 = por %p127, %p128
      %p131 = scmp.ne.s32.totalorder %s116, %s130
      %p132 = scmp.eq.s32.totalorder %s22, 0
      %p133 = por %p131, %p132
      %s135 = sadd.s32 %s134, 1
      %p138 = scmp.eq.s32.totalorder %s16, 1
      %p139 = scmp.ne.s32.totalorder %s134, %s136
      %p140 = scmp.eq.s32.totalorder %s16, 0
      %p141 = por %p139, %p140
      %p142 = scmp.ne.s32.totalorder %s134, %s136
      %p143 = scmp.eq.s32.totalorder %s21, 1
      %p144 = por %p142, %p143
      %p145 = scmp.ne.s32.totalorder %s136, %s137
      %p146 = scmp.eq.s32.totalorder %s21, 0
      %p147 = por %p145, %p146
      %p148 = scmp.ne.s32.totalorder %s136, %s137
      %p149 = scmp.eq.s32.totalorder %s22, 1
      %p150 = por %p148, %p149
      %p152 = scmp.ne.s32.totalorder %s137, %s151
      %p153 = scmp.eq.s32.totalorder %s22, 0
      %p154 = por %p152, %p153
      %s156 = sadd.s32 %s155, 1
      %p159 = scmp.eq.s32.totalorder %s16, 1
      %p160 = scmp.ne.s32.totalorder %s155, %s157
      %p161 = scmp.eq.s32.totalorder %s16, 0
      %p162 = por %p160, %p161
      %p163 = scmp.ne.s32.totalorder %s155, %s157
      %p164 = scmp.eq.s32.totalorder %s21, 1
      %p165 = por %p163, %p164
      %p166 = scmp.ne.s32.totalorder %s157, %s158
      %p167 = scmp.eq.s32.totalorder %s21, 0
      %p168 = por %p166, %p167
      %p169 = scmp.ne.s32.totalorder %s157, %s158
      %p170 = scmp.eq.s32.totalorder %s22, 1
      %p171 = por %p169, %p170
      %p173 = scmp.ne.s32.totalorder %s158, %s172
      %p174 = scmp.eq.s32.totalorder %s22, 0
      %p175 = por %p173, %p174
      %s176 = ssub.s32 %s16, %s23
      %p177 = scmp.eq.s32.totalorder %s176, 0
      %s179 = sadd.s32 %s178, 1
      %s180 = scalar_select %p177, %s178, %s179
      %p183 = pneg %p177
      %p184 = scmp.eq.s32.totalorder %s16, 1
      %p185 = por %p183, %p184
      %p186 = scmp.ne.s32.totalorder %s178, %s181
      %p187 = scmp.eq.s32.totalorder %s16, 0
      %p188 = por %p186, %p187
      %p189 = scmp.ne.s32.totalorder %s178, %s181
      %p190 = scmp.eq.s32.totalorder %s21, 1
      %p191 = por %p189, %p190
      %p192 = scmp.ne.s32.totalorder %s181, %s182
      %p193 = scmp.eq.s32.totalorder %s21, 0
      %p194 = por %p192, %p193
      %p195 = scmp.ne.s32.totalorder %s181, %s182
      %p196 = scmp.eq.s32.totalorder %s22, 1
      %p197 = por %p195, %p196
      %p199 = scmp.ne.s32.totalorder %s182, %s198
      %p200 = scmp.eq.s32.totalorder %s22, 0
      %p201 = por %p199, %p200
      %p202 = scmp.le.s32.totalorder 1, %s16
      %p203 = scmp.lt.s32.totalorder %s16, 3
      %p204 = pnand %p202, %p203
      %p205 = pneg %p204
      // Predicated region
      $region9: #{tpu_custom_call.1} parent=5 // pred_check
        _
      $region10: #{tpu_custom_call.1} parent=5 // pred_check_branch
        %207 = sbr.rel (%p204) target = $region12
      $region11: #{tpu_custom_call.1} parent=5 // pred_region
        %s208 = ssub.s32 %s16, 1
        // Predicated region
        $region13: #{tpu_custom_call.1} parent=11 // pred_check
          %p209 = pneg %p63
        $region14: #{tpu_custom_call.1} parent=11 // pred_check_branch
          %211 = sbr.rel (%p209) target = $region16
        $region15: #{tpu_custom_call.1} parent=11 // pred_region
          _
        $region16: #{tpu_custom_call.1} parent=11 // pred_fallthru
          _
        // Predicated region
        $region17: #{tpu_custom_call.1} parent=11 // pred_check
          %p212 = pneg %p84
        $region18: #{tpu_custom_call.1} parent=11 // pred_check_branch
          %214 = sbr.rel (%p212) target = $region20
        $region19: #{tpu_custom_call.1} parent=11 // pred_region
          _
        $region20: #{tpu_custom_call.1} parent=11 // pred_fallthru
          _
        // Predicated region
        $region21: #{tpu_custom_call.1} parent=11 // pred_check
          %p215 = pneg %p105
        $region22: #{tpu_custom_call.1} parent=11 // pred_check_branch
          %217 = sbr.rel (%p215) target = $region24
        $region23: #{tpu_custom_call.1} parent=11 // pred_region
          _
        $region24: #{tpu_custom_call.1} parent=11 // pred_fallthru
          _
        // Predicated region
        $region25: #{tpu_custom_call.1} parent=11 // pred_check
          %p218 = pneg %p126
        $region26: #{tpu_custom_call.1} parent=11 // pred_check_branch
          %220 = sbr.rel (%p218) target = $region28
        $region27: #{tpu_custom_call.1} parent=11 // pred_region
          _
        $region28: #{tpu_custom_call.1} parent=11 // pred_fallthru
          _
        // Predicated region
        $region29: #{tpu_custom_call.1} parent=11 // pred_check
          %p221 = pneg %p147
        $region30: #{tpu_custom_call.1} parent=11 // pred_check_branch
          %223 = sbr.rel (%p221) target = $region32
        $region31: #{tpu_custom_call.1} parent=11 // pred_region
          _
        $region32: #{tpu_custom_call.1} parent=11 // pred_fallthru
          _
        // Predicated region
        $region33: #{tpu_custom_call.1} parent=11 // pred_check
          %p224 = pneg %p168
        $region34: #{tpu_custom_call.1} parent=11 // pred_check_branch
          %226 = sbr.rel (%p224) target = $region36
        $region35: #{tpu_custom_call.1} parent=11 // pred_region
          _
        $region36: #{tpu_custom_call.1} parent=11 // pred_fallthru
          _
      $region12: #{tpu_custom_call.1} parent=5 // pred_fallthru
        _
      %p227 = scmp.lt.s32.totalorder %s16, 2
      // Predicated region
      $region37: #{tpu_custom_call.1} parent=5 // pred_check
        %p228 = pneg %p227
      $region38: #{tpu_custom_call.1} parent=5 // pred_check_branch
        %230 = sbr.rel (%p228) target = $region40
      $region39: #{tpu_custom_call.1} parent=5 // pred_region
        // Predicated region
        $region41: #{tpu_custom_call.1} parent=39 // pred_check
          %p231 = pneg %p36
        $region42: #{tpu_custom_call.1} parent=39 // pred_check_branch
          %233 = sbr.rel (%p231) target = $region44
        $region43: #{tpu_custom_call.1} parent=39 // pred_region
          %p234 = scmp.lt.s32.totalorder %s16, 1
          %s235 = scalar_select %p234, %s16, 1
          %s236 = smul.addr %s235, 8
          %s237 = smul.addr %s236, 8
          %s238 = scalar_lea.vmem %s0, %s237
        $region44: #{tpu_custom_call.1} parent=39 // pred_fallthru
          _
      $region40: #{tpu_custom_call.1} parent=5 // pred_fallthru
        _
      %p239 = scmp.le.s32.totalorder 1, %s16
      %p240 = scmp.lt.s32.totalorder %s16, 3
      %p241 = pnand %p239, %p240
      %p242 = pneg %p241
      // Predicated region
      $region45: #{tpu_custom_call.1} parent=5 // pred_check
        _
      $region46: #{tpu_custom_call.1} parent=5 // pred_check_branch
        %244 = sbr.rel (%p241) target = $region48
      $region47: #{tpu_custom_call.1} parent=5 // pred_region
        %s245 = ssub.s32 %s16, 1
        %p246 = scmp.lt.s32.totalorder %s21, 1
        %s247 = scalar_select %p246, %s21, 1
        %s248 = smul.addr %s247, 8
        %s249 = smul.addr %s248, 8
        %s250 = scalar_lea.vmem %s0, %s249
        %p251 = pneg %p42
        %p252 = pneg %p39
        %p253 = pneg %p63
        %p254 = pneg %p60
        %p255 = pneg %p84
        %p256 = pneg %p81
        %p257 = pneg %p105
        %p258 = pneg %p102
        %p259 = pneg %p126
        %p260 = pneg %p123
        %p261 = pneg %p147
        %p262 = pneg %p144
        %p263 = pneg %p168
        %p264 = pneg %p165
        %p265 = pneg %p194
        %p266 = pneg %p191
        %s267 = sand.u32 %s181, 1
        %s268 = scalar_lea.sflag [#allocation3], %s267
        %s269 = sand.u32 %s181, 1
        %s270 = smul.addr %s269, 64
        %s271 = scalar_lea.vmem [#allocation2], %s270
        %p272 = scmp.lt.s32.totalorder %s21, 1
        %s273 = scalar_select %p272, %s21, 1
        %s274 = smul.addr %s273, 8
        %s275 = smul.addr %s274, 8
        %s276 = scalar_lea.vmem %s0, %s275
        %v277 = vld [vmem:[%s276] sm:$0xff]
        %v278 = vld [vmem:[%s276 + $0x8] sm:$0xff]
        %v279 = vld [vmem:[%s276 + $0x10] sm:$0xff]
        %v280 = vld [vmem:[%s276 + $0x18] sm:$0xff]
        %v281 = vld [vmem:[%s276 + $0x20] sm:$0xff]
        %v282 = vld [vmem:[%s276 + $0x28] sm:$0xff]
        %v283 = vld [vmem:[%s276 + $0x30] sm:$0xff]
        %v284 = vld [vmem:[%s276 + $0x38] sm:$0xff]
        %v285 = vadd.f32 %v277, %v278
        %286 = vadd.xlane.f32.xlu0 %v285
        %v287 = vpop.xlane.xlu0 %286
        %v288 = vadd.f32 %v279, %v280
        %289 = vadd.xlane.f32.xlu0 %v288
        %v290 = vpop.xlane.xlu0 %289
        %v291 = vadd.f32 %v281, %v282
        %292 = vadd.xlane.f32.xlu0 %v291
        %v293 = vpop.xlane.xlu0 %292
        %v294 = vadd.f32 %v283, %v284
        %295 = vadd.xlane.f32.xlu0 %v294
        %v296 = vpop.xlane.xlu0 %295
        %v297 = vmul.f32 %v287, 0.00390625
        %v298 = vmul.f32 %v290, 0.00390625
        %v299 = vmul.f32 %v293, 0.00390625
        %v300 = vmul.f32 %v296, 0.00390625
        %v301 = vld [vmem:[%s1] sm:$0xff]
        %v302 = vld [vmem:[%s2] sm:$0xff]
        %vm303 = vcmask 261120
        %v305 = vsel %vm303, %v301, 0
        %307 = vmatprep.subr.mxu0 0.0
        %308 = vmatpush1.msra.mxu0 %v297
        %309 = vmatprep.subr.mxu0 0.0
        %310 = vmatpush1.msra.mxu0 %v298
        %311 = vmatprep.subr.mxu0 0.0
        %312 = vmatpush1.msra.mxu0 %v299
        %313 = vmatprep.subr.mxu0 0.0
        %314 = vmatpush1.msra.mxu0 %v300
        %315 = vmatprep.subr.mxu0 0.0
        %316 = vmatpush1.msra.mxu0 0.0
        %317 = vmatprep.subr.mxu0 0.0
        %318 = vmatpush1.msra.mxu0 0.0
        %319 = vmatprep.subr.mxu0 0.0
        %320 = vmatpush1.msra.mxu0 0.0
        %321 = vmatprep.subr.mxu0 0.0
        %322 = vmatpush1.msra.mxu0 0.0
        %323 = vmatprep.subr.mxu0 0.0
        %324 = vmatpush1.msra.mxu0 0.0
        %325 = vmatprep.subr.mxu0 0.0
        %326 = vmatpush1.msra.mxu0 0.0
        %327 = vmatprep.subr.mxu0 0.0
        %328 = vmatpush1.msra.mxu0 0.0
        %329 = vmatprep.subr.mxu0 0.0
        %330 = vmatpush1.msra.mxu0 0.0
        %331 = vmatprep.subr.mxu0 0.0
        %332 = vmatpush1.msra.mxu0 0.0
        %333 = vmatprep.subr.mxu0 0.0
        %334 = vmatpush1.msra.mxu0 0.0
        %335 = vmatprep.subr.mxu0 0.0
        %336 = vmatpush1.msra.mxu0 0.0
        %337 = vmatprep.subr.mxu0 0.0
        %338 = vmatpush1.msra.mxu0 0.0
        %339 = vmatprep.subr.mxu0 0.0
        %340 = vmatpush1.msra.mxu0 0.0
        %341 = vmatprep.subr.mxu0 0.0
        %342 = vmatpush1.msra.mxu0 0.0
        %343 = vmatprep.subr.mxu0 0.0
        %344 = vmatpush1.msra.mxu0 0.0
        %345 = vmatprep.subr.mxu0 0.0
        %346 = vmatpush1.msra.mxu0 0.0
        %347 = vmatprep.subr.mxu0 0.0
        %348 = vmatpush1.msra.mxu0 0.0
        %349 = vmatprep.subr.mxu0 0.0
        %350 = vmatpush1.msra.mxu0 0.0
        %351 = vmatprep.subr.mxu0 0.0
        %352 = vmatpush1.msra.mxu0 0.0
        %353 = vmatprep.subr.mxu0 0.0
        %354 = vmatpush1.msra.mxu0 0.0
        %355 = vmatprep.subr.mxu0 0.0
        %356 = vmatpush1.msra.mxu0 0.0
        %357 = vmatprep.subr.mxu0 0.0
        %358 = vmatpush1.msra.mxu0 0.0
        %359 = vmatprep.subr.mxu0 0.0
        %360 = vmatpush1.msra.mxu0 0.0
        %361 = vmatprep.subr.mxu0 0.0
        %362 = vmatpush1.msra.mxu0 0.0
        %363 = vmatprep.subr.mxu0 0.0
        %364 = vmatpush1.msra.mxu0 0.0
        %365 = vmatprep.subr.mxu0 0.0
        %366 = vmatpush1.msra.mxu0 0.0
        %367 = vmatprep.subr.mxu0 0.0
        %368 = vmatpush1.msra.mxu0 0.0
        %369 = vmatprep.subr.mxu0 0.0
        %370 = vmatpush1.msra.mxu0 0.0
        %371 = vmatprep.mubr.f32.mxu0 0.0
        %372 = vmatmul.mubr.f32.gmra.mrb[0].mxu0 %v305
        %v373 = vpop.f32.mrb[0].mxu0
        %v374 = vadd.f32 %v302, %v373
        %v375 = vpop.f32.mrb[0].mxu0
        %376 = vdwg.mxu0
        %v377 = vmax.f32 %v374, 0.0
        %v378 = vld [vmem:[%s3] sm:$0xff]
        %v379 = vld [vmem:[%s3 + $0x8] sm:$0xff]
        %v380 = vld [vmem:[%s3 + $0x10] sm:$0xff]
        %v381 = vld [vmem:[%s3 + $0x18] sm:$0xff]
        %v382 = vld [vmem:[%s3 + $0x20] sm:$0xff]
        %v383 = vld [vmem:[%s3 + $0x28] sm:$0xff]
        %v384 = vld [vmem:[%s3 + $0x30] sm:$0xff]
        %v385 = vld [vmem:[%s3 + $0x38] sm:$0xff]
        %v386 = vld [vmem:[%s3 + $0x40] sm:$0xff]
        %v387 = vld [vmem:[%s3 + $0x48] sm:$0xff]
        %v388 = vld [vmem:[%s3 + $0x50] sm:$0xff]
        %v389 = vld [vmem:[%s3 + $0x58] sm:$0xff]
        %v390 = vld [vmem:[%s3 + $0x60] sm:$0xff]
        %v391 = vld [vmem:[%s3 + $0x68] sm:$0xff]
        %v392 = vld [vmem:[%s3 + $0x70] sm:$0xff]
        %v393 = vld [vmem:[%s3 + $0x78] sm:$0xff]
        %v394 = vld [vmem:[%s4] sm:$0xff]
        %v395 = vld [vmem:[%s4 + $0x8] sm:$0xff]
        %v396 = vld [vmem:[%s4 + $0x10] sm:$0xff]
        %v397 = vld [vmem:[%s4 + $0x18] sm:$0xff]
        %v398 = vld [vmem:[%s4 + $0x20] sm:$0xff]
        %v399 = vld [vmem:[%s4 + $0x28] sm:$0xff]
        %v400 = vld [vmem:[%s4 + $0x30] sm:$0xff]
        %v401 = vld [vmem:[%s4 + $0x38] sm:$0xff]
        %v402 = vld [vmem:[%s4 + $0x40] sm:$0xff]
        %v403 = vld [vmem:[%s4 + $0x48] sm:$0xff]
        %v404 = vld [vmem:[%s4 + $0x50] sm:$0xff]
        %v405 = vld [vmem:[%s4 + $0x58] sm:$0xff]
        %v406 = vld [vmem:[%s4 + $0x60] sm:$0xff]
        %v407 = vld [vmem:[%s4 + $0x68] sm:$0xff]
        %v408 = vld [vmem:[%s4 + $0x70] sm:$0xff]
        %v409 = vld [vmem:[%s4 + $0x78] sm:$0xff]
        %vm410 = vcmask 64512
        %v412 = vsel %vm410, %v378, 0
        %v415 = vsel %vm410, %v379, 0
        %v418 = vsel %vm410, %v380, 0
        %v421 = vsel %vm410, %v381, 0
        %v424 = vsel %vm410, %v382, 0
        %v427 = vsel %vm410, %v383, 0
        %v430 = vsel %vm410, %v384, 0
        %v433 = vsel %vm410, %v385, 0
        %v436 = vsel %vm410, %v386, 0
        %v439 = vsel %vm410, %v387, 0
        %v442 = vsel %vm410, %v388, 0
        %v445 = vsel %vm410, %v389, 0
        %v448 = vsel %vm410, %v390, 0
        %v451 = vsel %vm410, %v391, 0
        %v454 = vsel %vm410, %v392, 0
        %v457 = vsel %vm410, %v393, 0
        %459 = vmatprep.subr.mxu0 0.0
        %460 = vmatpush1.msra.mxu0 %v377
        %461 = vmatprep.subr.mxu0 0.0
        %462 = vmatpush1.msra.mxu0 0.0
        %463 = vmatprep.subr.mxu0 0.0
        %464 = vmatpush1.msra.mxu0 0.0
        %465 = vmatprep.subr.mxu0 0.0
        %466 = vmatpush1.msra.mxu0 0.0
        %467 = vmatprep.subr.mxu0 0.0
        %468 = vmatpush1.msra.mxu0 0.0
        %469 = vmatprep.subr.mxu0 0.0
        %470 = vmatpush1.msra.mxu0 0.0
        %471 = vmatprep.subr.mxu0 0.0
        %472 = vmatpush1.msra.mxu0 0.0
        %473 = vmatprep.subr.mxu0 0.0
        %474 = vmatpush1.msra.mxu0 0.0
        %475 = vmatprep.subr.mxu0 0.0
        %476 = vmatpush1.msra.mxu0 0.0
        %477 = vmatprep.subr.mxu0 0.0
        %478 = vmatpush1.msra.mxu0 0.0
        %479 = vmatprep.subr.mxu0 0.0
        %480 = vmatpush1.msra.mxu0 0.0
        %481 = vmatprep.subr.mxu0 0.0
        %482 = vmatpush1.msra.mxu0 0.0
        %483 = vmatprep.subr.mxu0 0.0
        %484 = vmatpush1.msra.mxu0 0.0
        %485 = vmatprep.subr.mxu0 0.0
        %486 = vmatpush1.msra.mxu0 0.0
        %487 = vmatprep.subr.mxu0 0.0
        %488 = vmatpush1.msra.mxu0 0.0
        %489 = vmatprep.subr.mxu0 0.0
        %490 = vmatpush1.msra.mxu0 0.0
        %491 = vmatprep.subr.mxu0 0.0
        %492 = vmatpush1.msra.mxu0 0.0
        %493 = vmatprep.subr.mxu0 0.0
        %494 = vmatpush1.msra.mxu0 0.0
        %495 = vmatprep.subr.mxu0 0.0
        %496 = vmatpush1.msra.mxu0 0.0
        %497 = vmatprep.subr.mxu0 0.0
        %498 = vmatpush1.msra.mxu0 0.0
        %499 = vmatprep.subr.mxu0 0.0
        %500 = vmatpush1.msra.mxu0 0.0
        %501 = vmatprep.subr.mxu0 0.0
        %502 = vmatpush1.msra.mxu0 0.0
        %503 = vmatprep.subr.mxu0 0.0
        %504 = vmatpush1.msra.mxu0 0.0
        %505 = vmatprep.subr.mxu0 0.0
        %506 = vmatpush1.msra.mxu0 0.0
        %507 = vmatprep.subr.mxu0 0.0
        %508 = vmatpush1.msra.mxu0 0.0
        %509 = vmatprep.subr.mxu0 0.0
        %510 = vmatpush1.msra.mxu0 0.0
        %511 = vmatprep.subr.mxu0 0.0
        %512 = vmatpush1.msra.mxu0 0.0
        %513 = vmatprep.subr.mxu0 0.0
        %514 = vmatpush1.msra.mxu0 0.0
        %515 = vmatprep.subr.mxu0 0.0
        %516 = vmatpush1.msra.mxu0 0.0
        %517 = vmatprep.subr.mxu0 0.0
        %518 = vmatpush1.msra.mxu0 0.0
        %519 = vmatprep.subr.mxu0 0.0
        %520 = vmatpush1.msra.mxu0 0.0
        %521 = vmatprep.subr.mxu0 0.0
        %522 = vmatpush1.msra.mxu0 0.0
        %523 = vmatprep.mubr.f32.mxu0 0.0
        %524 = vmatmul.mubr.f32.gmra.mrb[0].mxu0 %v412
        %v525 = vpop.f32.mrb[0].mxu0
        %v526 = vadd.f32 %v394, %v525
        %v527 = vpop.f32.mrb[0].mxu0
        %528 = vmatprep.mubr.f32.mxu0 0.0
        %529 = vmatmul.mubr.f32.gmra.mrb[0].mxu0 %v415
        %v530 = vpop.f32.mrb[0].mxu0
        %v531 = vadd.f32 %v395, %v530
        %v532 = vpop.f32.mrb[0].mxu0
        %533 = vmatprep.mubr.f32.mxu0 0.0
        %534 = vmatmul.mubr.f32.gmra.mrb[0].mxu0 %v418
        %v535 = vpop.f32.mrb[0].mxu0
        %v536 = vadd.f32 %v396, %v535
        %v537 = vpop.f32.mrb[0].mxu0
        %538 = vmatprep.mubr.f32.mxu0 0.0
        %539 = vmatmul.mubr.f32.gmra.mrb[0].mxu0 %v421
        %v540 = vpop.f32.mrb[0].mxu0
        %v541 = vadd.f32 %v397, %v540
        %v542 = vpop.f32.mrb[0].mxu0
        %543 = vmatprep.mubr.f32.mxu0 0.0
        %544 = vmatmul.mubr.f32.gmra.mrb[0].mxu0 %v424
        %v545 = vpop.f32.mrb[0].mxu0
        %v546 = vadd.f32 %v398, %v545
        %v547 = vpop.f32.mrb[0].mxu0
        %548 = vmatprep.mubr.f32.mxu0 0.0
        %549 = vmatmul.mubr.f32.gmra.mrb[0].mxu0 %v427
        %v550 = vpop.f32.mrb[0].mxu0
        %v551 = vadd.f32 %v399, %v550
        %v552 = vpop.f32.mrb[0].mxu0
        %553 = vmatprep.mubr.f32.mxu0 0.0
        %554 = vmatmul.mubr.f32.gmra.mrb[0].mxu0 %v430
        %v555 = vpop.f32.mrb[0].mxu0
        %v556 = vadd.f32 %v400, %v555
        %v557 = vpop.f32.mrb[0].mxu0
        %558 = vmatprep.mubr.f32.mxu0 0.0
        %559 = vmatmul.mubr.f32.gmra.mrb[0].mxu0 %v433
        %v560 = vpop.f32.mrb[0].mxu0
        %v561 = vadd.f32 %v401, %v560
        %v562 = vpop.f32.mrb[0].mxu0
        %563 = vmatprep.mubr.f32.mxu0 0.0
        %564 = vmatmul.mubr.f32.gmra.mrb[0].mxu0 %v436
        %v565 = vpop.f32.mrb[0].mxu0
        %v566 = vadd.f32 %v402, %v565
        %v567 = vpop.f32.mrb[0].mxu0
        %568 = vmatprep.mubr.f32.mxu0 0.0
        %569 = vmatmul.mubr.f32.gmra.mrb[0].mxu0 %v439
        %v570 = vpop.f32.mrb[0].mxu0
        %v571 = vadd.f32 %v403, %v570
        %v572 = vpop.f32.mrb[0].mxu0
        %573 = vmatprep.mubr.f32.mxu0 0.0
        %574 = vmatmul.mubr.f32.gmra.mrb[0].mxu0 %v442
        %v575 = vpop.f32.mrb[0].mxu0
        %v576 = vadd.f32 %v404, %v575
        %v577 = vpop.f32.mrb[0].mxu0
        %578 = vmatprep.mubr.f32.mxu0 0.0
        %579 = vmatmul.mubr.f32.gmra.mrb[0].mxu0 %v445
        %v580 = vpop.f32.mrb[0].mxu0
        %v581 = vadd.f32 %v405, %v580
        %v582 = vpop.f32.mrb[0].mxu0
        %583 = vmatprep.mubr.f32.mxu0 0.0
        %584 = vmatmul.mubr.f32.gmra.mrb[0].mxu0 %v448
        %v585 = vpop.f32.mrb[0].mxu0
        %v586 = vadd.f32 %v406, %v585
        %v587 = vpop.f32.mrb[0].mxu0
        %588 = vmatprep.mubr.f32.mxu0 0.0
        %589 = vmatmul.mubr.f32.gmra.mrb[0].mxu0 %v451
        %v590 = vpop.f32.mrb[0].mxu0
        %v591 = vadd.f32 %v407, %v590
        %v592 = vpop.f32.mrb[0].mxu0
        %593 = vmatprep.mubr.f32.mxu0 0.0
        %594 = vmatmul.mubr.f32.gmra.mrb[0].mxu0 %v454
        %v595 = vpop.f32.mrb[0].mxu0
        %v596 = vadd.f32 %v408, %v595
        %v597 = vpop.f32.mrb[0].mxu0
        %598 = vmatprep.mubr.f32.mxu0 0.0
        %599 = vmatmul.mubr.f32.gmra.mrb[0].mxu0 %v457
        %v600 = vpop.f32.mrb[0].mxu0
        %v601 = vadd.f32 %v409, %v600
        %v602 = vpop.f32.mrb[0].mxu0
        %603 = vdwg.mxu0
        %v604 = vadd.f32 %v526, 3.0
        %v605 = vadd.f32 %v531, 3.0
        %v606 = vadd.f32 %v536, 3.0
        %v607 = vadd.f32 %v541, 3.0
        %v608 = vadd.f32 %v546, 3.0
        %v609 = vadd.f32 %v551, 3.0
        %v610 = vadd.f32 %v556, 3.0
        %v611 = vadd.f32 %v561, 3.0
        %v612 = vadd.f32 %v566, 3.0
        %v613 = vadd.f32 %v571, 3.0
        %v614 = vadd.f32 %v576, 3.0
        %v615 = vadd.f32 %v581, 3.0
        %v616 = vadd.f32 %v586, 3.0
        %v617 = vadd.f32 %v591, 3.0
        %v618 = vadd.f32 %v596, 3.0
        %v619 = vadd.f32 %v601, 3.0
        %v620 = vmax.f32 %v604, 0.0
        %v621 = vmax.f32 %v605, 0.0
        %v622 = vmax.f32 %v606, 0.0
        %v623 = vmax.f32 %v607, 0.0
        %v624 = vmax.f32 %v608, 0.0
        %v625 = vmax.f32 %v609, 0.0
        %v626 = vmax.f32 %v610, 0.0
        %v627 = vmax.f32 %v611, 0.0
        %v628 = vmax.f32 %v612, 0.0
        %v629 = vmax.f32 %v613, 0.0
        %v630 = vmax.f32 %v614, 0.0
        %v631 = vmax.f32 %v615, 0.0
        %v632 = vmax.f32 %v616, 0.0
        %v633 = vmax.f32 %v617, 0.0
        %v634 = vmax.f32 %v618, 0.0
        %v635 = vmax.f32 %v619, 0.0
        %v636 = vmin.f32 %v620, 6.0
        %v637 = vmin.f32 %v621, 6.0
        %v638 = vmin.f32 %v622, 6.0
        %v639 = vmin.f32 %v623, 6.0
        %v640 = vmin.f32 %v624, 6.0
        %v641 = vmin.f32 %v625, 6.0
        %v642 = vmin.f32 %v626, 6.0
        %v643 = vmin.f32 %v627, 6.0
        %v644 = vmin.f32 %v628, 6.0
        %v645 = vmin.f32 %v629, 6.0
        %v646 = vmin.f32 %v630, 6.0
        %v647 = vmin.f32 %v631, 6.0
        %v648 = vmin.f32 %v632, 6.0
        %v649 = vmin.f32 %v633, 6.0
        %v650 = vmin.f32 %v634, 6.0
        %v651 = vmin.f32 %v635, 6.0
        %v652 = vmul.f32 %v636, 0.16666667
        %v653 = vmul.f32 %v637, 0.16666667
        %v654 = vmul.f32 %v638, 0.16666667
        %v655 = vmul.f32 %v639, 0.16666667
        %v656 = vmul.f32 %v640, 0.16666667
        %v657 = vmul.f32 %v641, 0.16666667
        %v658 = vmul.f32 %v642, 0.16666667
        %v659 = vmul.f32 %v643, 0.16666667
        %v660 = vmul.f32 %v644, 0.16666667
        %v661 = vmul.f32 %v645, 0.16666667
        %v662 = vmul.f32 %v646, 0.16666667
        %v663 = vmul.f32 %v647, 0.16666667
        %v664 = vmul.f32 %v648, 0.16666667
        %v665 = vmul.f32 %v649, 0.16666667
        %v666 = vmul.f32 %v650, 0.16666667
        %v667 = vmul.f32 %v651, 0.16666667
        %v668 = vld [vmem:[%s5] sm:$0xff]
        %v669 = vld [vmem:[%s5 + $0x8] sm:$0xff]
        %v670 = vld [vmem:[%s5 + $0x10] sm:$0xff]
        %v671 = vld [vmem:[%s5 + $0x18] sm:$0xff]
        %v672 = vld [vmem:[%s5 + $0x20] sm:$0xff]
        %v673 = vld [vmem:[%s5 + $0x28] sm:$0xff]
        %v674 = vld [vmem:[%s5 + $0x30] sm:$0xff]
        %v675 = vld [vmem:[%s5 + $0x38] sm:$0xff]
        %v676 = vld [vmem:[%s5 + $0x40] sm:$0xff]
        %v677 = vld [vmem:[%s5 + $0x48] sm:$0xff]
        %v678 = vld [vmem:[%s5 + $0x50] sm:$0xff]
        %v679 = vld [vmem:[%s5 + $0x58] sm:$0xff]
        %v680 = vld [vmem:[%s5 + $0x60] sm:$0xff]
        %v681 = vld [vmem:[%s5 + $0x68] sm:$0xff]
        %v682 = vld [vmem:[%s5 + $0x70] sm:$0xff]
        %v683 = vld [vmem:[%s5 + $0x78] sm:$0xff]
        %v684 = vmul.f32 %v652, %v668
        %v685 = vmul.f32 %v653, %v669
        %v686 = vmul.f32 %v654, %v670
        %v687 = vmul.f32 %v655, %v671
        %v688 = vmul.f32 %v656, %v672
        %v689 = vmul.f32 %v657, %v673
        %v690 = vmul.f32 %v658, %v674
        %v691 = vmul.f32 %v659, %v675
        %v692 = vmul.f32 %v660, %v676
        %v693 = vmul.f32 %v661, %v677
        %v694 = vmul.f32 %v662, %v678
        %v695 = vmul.f32 %v663, %v679
        %v696 = vmul.f32 %v664, %v680
        %v697 = vmul.f32 %v665, %v681
        %v698 = vmul.f32 %v666, %v682
        %v699 = vmul.f32 %v667, %v683
        %v700 = vld [vmem:[%s6] sm:$0xff]
        %v701 = vld [vmem:[%s6 + $0x8] sm:$0xff]
        %v702 = vld [vmem:[%s6 + $0x10] sm:$0xff]
        %v703 = vld [vmem:[%s6 + $0x18] sm:$0xff]
        %v704 = vld [vmem:[%s6 + $0x20] sm:$0xff]
        %v705 = vld [vmem:[%s6 + $0x28] sm:$0xff]
        %v706 = vld [vmem:[%s6 + $0x30] sm:$0xff]
        %v707 = vld [vmem:[%s6 + $0x38] sm:$0xff]
        %v708 = vld [vmem:[%s6 + $0x40] sm:$0xff]
        %v709 = vld [vmem:[%s6 + $0x48] sm:$0xff]
        %v710 = vld [vmem:[%s6 + $0x50] sm:$0xff]
        %v711 = vld [vmem:[%s6 + $0x58] sm:$0xff]
        %v712 = vld [vmem:[%s6 + $0x60] sm:$0xff]
        %v713 = vld [vmem:[%s6 + $0x68] sm:$0xff]
        %v714 = vld [vmem:[%s6 + $0x70] sm:$0xff]
        %v715 = vld [vmem:[%s6 + $0x78] sm:$0xff]
        %v716 = vadd.f32 %v684, %v700
        %v717 = vadd.f32 %v685, %v701
        %v718 = vadd.f32 %v686, %v702
        %v719 = vadd.f32 %v687, %v703
        %v720 = vadd.f32 %v688, %v704
        %v721 = vadd.f32 %v689, %v705
        %v722 = vadd.f32 %v690, %v706
        %v723 = vadd.f32 %v691, %v707
        %v724 = vadd.f32 %v692, %v708
        %v725 = vadd.f32 %v693, %v709
        %v726 = vadd.f32 %v694, %v710
        %v727 = vadd.f32 %v695, %v711
        %v728 = vadd.f32 %v696, %v712
        %v729 = vadd.f32 %v697, %v713
        %v730 = vadd.f32 %v698, %v714
        %v731 = vadd.f32 %v699, %v715
        %733 = vset.pattern.permute.xlu0 0
        %734 = vperm.xlu0 %733, %v716
        %v735 = vpop.permute.xlu0 %734
        %738 = vset.pattern.permute.xlu0 0
        %739 = vperm.xlu0 %738, %v717
        %v740 = vpop.permute.xlu0 %739
        %743 = vset.pattern.permute.xlu0 0
        %744 = vperm.xlu0 %743, %v718
        %v745 = vpop.permute.xlu0 %744
        %748 = vset.pattern.permute.xlu0 0
        %749 = vperm.xlu0 %748, %v719
        %v750 = vpop.permute.xlu0 %749
        %v752 = vmul.f32 %v277, %v735
        %v753 = vmul.f32 %v278, %v735
        %v754 = vmul.f32 %v279, %v740
        %v755 = vmul.f32 %v280, %v740
        %v756 = vmul.f32 %v281, %v745
        %v757 = vmul.f32 %v282, %v745
        %v758 = vmul.f32 %v283, %v750
        %v759 = vmul.f32 %v284, %v750
        %761 = vset.pattern.permute.xlu0 0
        %762 = vperm.xlu0 %761, %v720
        %v763 = vpop.permute.xlu0 %762
        %766 = vset.pattern.permute.xlu0 0
        %767 = vperm.xlu0 %766, %v721
        %v768 = vpop.permute.xlu0 %767
        %771 = vset.pattern.permute.xlu0 0
        %772 = vperm.xlu0 %771, %v722
        %v773 = vpop.permute.xlu0 %772
        %776 = vset.pattern.permute.xlu0 0
        %777 = vperm.xlu0 %776, %v723
        %v778 = vpop.permute.xlu0 %777
        %v780 = vadd.f32 %v752, %v763
        %v781 = vadd.f32 %v753, %v763
        %v782 = vadd.f32 %v754, %v768
        %v783 = vadd.f32 %v755, %v768
        %v784 = vadd.f32 %v756, %v773
        %v785 = vadd.f32 %v757, %v773
        %v786 = vadd.f32 %v758, %v778
        %v787 = vadd.f32 %v759, %v778
        %789 = vset.pattern.permute.xlu0 0
        %790 = vperm.xlu0 %789, %v724
        %v791 = vpop.permute.xlu0 %790
        %794 = vset.pattern.permute.xlu0 0
        %795 = vperm.xlu0 %794, %v725
        %v796 = vpop.permute.xlu0 %795
        %799 = vset.pattern.permute.xlu0 0
        %800 = vperm.xlu0 %799, %v726
        %v801 = vpop.permute.xlu0 %800
        %804 = vset.pattern.permute.xlu0 0
        %805 = vperm.xlu0 %804, %v727
        %v806 = vpop.permute.xlu0 %805
        %v808 = vmul.f32 %v277, %v791
        %v809 = vmul.f32 %v278, %v791
        %v810 = vmul.f32 %v279, %v796
        %v811 = vmul.f32 %v280, %v796
        %v812 = vmul.f32 %v281, %v801
        %v813 = vmul.f32 %v282, %v801
        %v814 = vmul.f32 %v283, %v806
        %v815 = vmul.f32 %v284, %v806
        %817 = vset.pattern.permute.xlu0 0
        %818 = vperm.xlu0 %817, %v728
        %v819 = vpop.permute.xlu0 %818
        %822 = vset.pattern.permute.xlu0 0
        %823 = vperm.xlu0 %822, %v729
        %v824 = vpop.permute.xlu0 %823
        %827 = vset.pattern.permute.xlu0 0
        %828 = vperm.xlu0 %827, %v730
        %v829 = vpop.permute.xlu0 %828
        %832 = vset.pattern.permute.xlu0 0
        %833 = vperm.xlu0 %832, %v731
        %v834 = vpop.permute.xlu0 %833
        %v836 = vadd.f32 %v808, %v819
        %v837 = vadd.f32 %v809, %v819
        %v838 = vadd.f32 %v810, %v824
        %v839 = vadd.f32 %v811, %v824
        %v840 = vadd.f32 %v812, %v829
        %v841 = vadd.f32 %v813, %v829
        %v842 = vadd.f32 %v814, %v834
        %v843 = vadd.f32 %v815, %v834
        %v844 = vmax.f32 %v780, %v836
        %v845 = vmax.f32 %v781, %v837
        %v846 = vmax.f32 %v782, %v838
        %v847 = vmax.f32 %v783, %v839
        %v848 = vmax.f32 %v784, %v840
        %v849 = vmax.f32 %v785, %v841
        %v850 = vmax.f32 %v786, %v842
        %v851 = vmax.f32 %v787, %v843
        %852 = vst [vmem:[%s271] sm:$0xff] %v844
        %853 = vst [vmem:[%s271 + $0x8] sm:$0xff] %v845
        %854 = vst [vmem:[%s271 + $0x10] sm:$0xff] %v846
        %855 = vst [vmem:[%s271 + $0x18] sm:$0xff] %v847
        %856 = vst [vmem:[%s271 + $0x20] sm:$0xff] %v848
        %857 = vst [vmem:[%s271 + $0x28] sm:$0xff] %v849
        %858 = vst [vmem:[%s271 + $0x30] sm:$0xff] %v850
        %859 = vst [vmem:[%s271 + $0x38] sm:$0xff] %v851
        %s860 = sand.u32 %s181, 1
        %s861 = scalar_lea.sflag [#allocation3], %s860
        %s862 = sand.u32 %s181, 1
        %s863 = smul.addr %s862, 64
        %s864 = scalar_lea.vmem [#allocation2], %s863
        // Predicated region
        $region49: #{tpu_custom_call.1} parent=47 // pred_check
          %p865 = pneg %p191
        $region50: #{tpu_custom_call.1} parent=47 // pred_check_branch
          %867 = sbr.rel (%p865) target = $region52
        $region51: #{tpu_custom_call.1} parent=47 // pred_region
          %s869 = ssub.s32 1024, 1024
          %870 = vsyncadd %s861, %s869
          %s871 = smul.addr %s21, 8
          %s872 = smul.addr %s871, 128
          %s873 = scalar_lea.hbm %s7, %s872
          %s874 = sshll.u32 %s864, 4
          %s875 = int_to_ptr.vmem [resolvable:$true] %s874
          %880 = dma.vmem_to_hbm [thread:$0]  %s875, 1024, %s873, %s861, 256, 256, 16
        $region52: #{tpu_custom_call.1} parent=47 // pred_fallthru
          _
      $region48: #{tpu_custom_call.1} parent=5 // pred_fallthru
        _
      %p881 = scmp.le.s32.totalorder 2, %s16
      // Predicated region
      $region53: #{tpu_custom_call.1} parent=5 // pred_check
        %p882 = pneg %p881
      $region54: #{tpu_custom_call.1} parent=5 // pred_check_branch
        %884 = sbr.rel (%p882) target = $region56
      $region55: #{tpu_custom_call.1} parent=5 // pred_region
        %s885 = ssub.s32 %s16, 2
        // Predicated region
        $region57: #{tpu_custom_call.1} parent=55 // pred_check
          %p886 = pneg %p197
        $region58: #{tpu_custom_call.1} parent=55 // pred_check_branch
          %888 = sbr.rel (%p886) target = $region60
        $region59: #{tpu_custom_call.1} parent=55 // pred_region
          %s889 = sand.u32 %s182, 1
          %s890 = scalar_lea.sflag [#allocation3], %s889
          %s891 = sand.u32 %s182, 1
          %s892 = smul.addr %s891, 64
          %s893 = scalar_lea.vmem [#allocation2], %s892
          %894 = dma.done %s890, 1024
        $region60: #{tpu_custom_call.1} parent=55 // pred_fallthru
          _
      $region56: #{tpu_custom_call.1} parent=5 // pred_fallthru
        _
    $region6: #{tpu_custom_call.1} parent=1 // loop_footer
      %s20 = sadd.s32 1, %s16
    $region7: #{tpu_custom_call.1} parent=1 // loop_footer_branch
      %15 = sbr.rel target = $region3
    $region8: #{tpu_custom_call.1} parent=1 // loop_exit
      _
    %895 = vsyncpa [#allocation3], 1
    %s896 = scalar_lea.sflag [#allocation3], 1
    %897 = vsyncpa %s896, 1

</llo_original>
